<compile_context>
chip_gen: v7x
topology: tpu7x:2x2x1
jax: 0.10.0
libtpu: 0.0.40
codegen_flags: <defaults>
</compile_context>

<pallas_src>
import jax
import jax.numpy as jnp
from jax import lax
from jax.experimental import pallas as pl
from jax.experimental.pallas import tpu as pltpu
import numpy as np


def _fused_axis_attention_kernel(gamma_ref, w_ref, b_ref, x_ref, merged_ref, attn_ref):
    """One grid step == one batch element.

    gamma_ref : SMEM (1,)
    w_ref     : (3*Wd, C*G)  kron-expanded QKV 1x1-conv weight
    b_ref     : (3*Wd, D)    bias, pre-broadcast along D (materialized once at prep time)
    x_ref     : (C*G, D)     this batch's input, already in the folded view layout
    merged_ref: (4*Wd, D)    rows [0:3Wd] = relu(conv) = [q; k; v], rows [3Wd:4Wd] = (gamma*out1)^T
    attn_ref  : (Wd, Wd)     softmax attention weights
    """
    Wd = attn_ref.shape[0]

    # Fused Q/K/V 1x1 conv (+ bias + ReLU), emitted directly in the (Wd, D) view layout.
    act = jnp.maximum(
        jnp.dot(w_ref[...], x_ref[...], preferred_element_type=jnp.float32) + b_ref[...],
        0.0)                                                        # (3*Wd, D)
    q = act[0 * Wd:1 * Wd, :]                                       # (Wd, D) == x_Qw[b]
    k = act[1 * Wd:2 * Wd, :]                                       # (Wd, D) == x_Kw[b]^T
    v = act[2 * Wd:3 * Wd, :]                                       # (Wd, D) == x_Vw[b]^T

    # energy[w, u] = sum_d q[w, d] * k[u, d]  ==  (x_Qw @ x_Kw)[b]
    # (rhs-transposed contraction -> no explicit k.T materialized, less XLU work)
    s = lax.dot_general(q, k, (((1,), (1,)), ((), ())),
                        preferred_element_type=jnp.float32)         # (Wd, Wd)

    # Softmax over torch dim=1 == axis 0 of the per-batch (Wd, Wd) matrix; exact divide.
    m = jnp.max(s, axis=0, keepdims=True)
    e = jnp.exp(s - m)
    a = e / jnp.sum(e, axis=0, keepdims=True)
    attn_ref[...] = a

    # (gamma * out1)^T = (gamma * A)^T @ v ; gamma folded into the tiny (Wd, Wd) operand.
    gamma = gamma_ref[0]
    out_t = jnp.dot(a.T * gamma, v, preferred_element_type=jnp.float32)   # (Wd, D)

    # Lane-dense stores into a single merged output (D lanes wide).
    merged_ref[0:3 * Wd, :] = act
    merged_ref[3 * Wd:4 * Wd, :] = out_t


def prepare_axis_attention_params(wq, bq, wk, bk, wv, bv, H, W):
    """Parameter prep (kron-folded .view).  Call ONCE, outside the per-call jit."""
    Cr, C = wq.shape
    D = Cr * H
    assert Cr == C, "module's final .view(batch, channel, H, W) requires ration == 1"
    assert W % Cr == 0, "kron folding of the .view requires Cr to divide Width"
    G = W // Cr                                                    # Cr * G == Width
    w_all = jnp.concatenate([wq, wk, wv], axis=0).astype(jnp.float32)   # (3*Cr, C)
    b_all = jnp.concatenate([bq, bk, bv], axis=0).astype(jnp.float32)   # (3*Cr,)
    w_exp = jnp.kron(w_all, jnp.eye(G, dtype=jnp.float32))              # (3*W, C*G)
    b_full = jnp.asarray(
        jnp.broadcast_to(jnp.repeat(b_all, G)[:, None], (3 * Cr * G, D)))  # (3*W, D)
    return w_exp, b_full


@jax.jit
def axis_portrait_attention(x, w_exp, b_full, gamma):
    B, C, H, Wd = x.shape
    R, CG = w_exp.shape            # R == 3*Wd, CG == C*G
    D = b_full.shape[1]            # D == Cr*H
    assert R == 3 * Wd and CG * D == C * H * Wd

    # Free flat reshape: (B, C, H, W) -> (B, C*G, D), same element order.
    x_r = x.astype(jnp.float32).reshape(B, CG, D)
    gamma_smem = gamma.astype(jnp.float32).reshape(1)

    merged, attn = pl.pallas_call(
        _fused_axis_attention_kernel,
        out_shape=(
            jax.ShapeDtypeStruct((B, 4 * Wd, D), jnp.float32),   # [q; k; v; (gamma*out1)^T]
            jax.ShapeDtypeStruct((B, Wd, Wd), jnp.float32),      # attention weights
        ),
        grid=(B,),                                               # one batch per grid step
        in_specs=[
            pl.BlockSpec(memory_space=pltpu.MemorySpace.SMEM),             # gamma
            pl.BlockSpec((R, CG), lambda b: (0, 0)),                       # weight (resident)
            pl.BlockSpec((R, D), lambda b: (0, 0)),                        # bias   (resident)
            pl.BlockSpec((None, CG, D), lambda b: (b, 0, 0)),              # x, per batch
        ],
        out_specs=(
            pl.BlockSpec((None, 4 * Wd, D), lambda b: (b, 0, 0)),
            pl.BlockSpec((None, Wd, Wd), lambda b: (b, 0, 0)),
        ),
        compiler_params=pltpu.CompilerParams(dimension_semantics=("parallel",)),
    )(gamma_smem, w_exp, b_full, x_r)

    # Tiny (8 KB) XLA splits/transposes of the lane-dense merged output.
    x_Qw = merged[:, 0 * Wd:1 * Wd, :]                                    # (B, Wd, D)
    x_Kw = jnp.transpose(merged[:, 1 * Wd:2 * Wd, :], (0, 2, 1))          # (B, D, Wd)
    x_Vw = jnp.transpose(merged[:, 2 * Wd:3 * Wd, :], (0, 2, 1))          # (B, D, Wd)
    out_w = jnp.transpose(merged[:, 3 * Wd:4 * Wd, :], (0, 2, 1)).reshape(B, C, H, Wd)
    return out_w, x_Qw, x_Kw, x_Vw, gamma, attn


# ---- pure-JAX reference of the PyTorch forward (for validation) ----------------------
def ref_forward(x, wq, bq, wk, bk, wv, bv, gamma):
    B, C, H, W = x.shape
    Cr = wq.shape[0]
    D = Cr * H

    def conv_relu(w, b):
        y = jnp.einsum('oc,bchw->bohw', w, x) + b[None, :, None, None]
        return jnp.maximum(y, 0.0)

    q = conv_relu(wq, bq)
    k = conv_relu(wk, bk)
    v = conv_relu(wv, bv)
    x_Qw = q.reshape(B, W, D)
    x_Kw = jnp.transpose(k.reshape(B, W, D), (0, 2, 1))
    x_Vw = jnp.transpose(v.reshape(B, W, D), (0, 2, 1))
    s = jnp.einsum('bwd,bdu->bwu', x_Qw, x_Kw)
    a = jax.nn.softmax(s, axis=1)                    # torch Softmax(dim=1)
    out1 = jnp.einsum('bdw,bwu->bdu', x_Vw, a)
    out_w = out1.reshape(B, C, H, W) * gamma
    return out_w, x_Qw, x_Kw, x_Vw, gamma, a


if __name__ == "__main__":
    key = jax.random.PRNGKey(0)
    B, C, H, W = 2, 4, 16, 16
    ration = 1                      # final .view requires ration == 1
    Cr = C // ration

    ks = jax.random.split(key, 7)
    x = jax.random.normal(ks[0], (B, C, H, W), jnp.float32)
    wq = 0.2 * jax.random.normal(ks[1], (Cr, C), jnp.float32)
    bq = 0.1 * jax.random.normal(ks[2], (Cr,), jnp.float32)
    wk = 0.2 * jax.random.normal(ks[3], (Cr, C), jnp.float32)
    bk = 0.1 * jax.random.normal(ks[4], (Cr,), jnp.float32)
    wv = 0.2 * jax.random.normal(ks[5], (Cr, C), jnp.float32)
    bv = 0.1 * jax.random.normal(ks[6], (Cr,), jnp.float32)
    # PyTorch initializes gamma_w = zeros(1); use a nonzero value so the scale path
    # is actually exercised.
    gamma = jnp.array([0.5], jnp.float32)

    # Parameter prep (kron-expanded weight + broadcast bias) happens ONCE, outside the
    # jitted per-call path.
    w_exp, b_full = prepare_axis_attention_params(wq, bq, wk, bk, wv, bv, H, W)

    outs = axis_portrait_attention(x, w_exp, b_full, gamma)
    outs = jax.block_until_ready(outs)

    refs = ref_forward(x, wq, bq, wk, bk, wv, bv, gamma)
    for got, want in zip(outs, refs):
        np.testing.assert_allclose(np.asarray(got), np.asarray(want), rtol=1e-2, atol=1e-3)

    print("KERNEL_OK")
</pallas_src>

<mosaic_0001>
module attributes {stable_mosaic.version = 11 : i64} {
  func.func @_fused_axis_attention_kernel(%arg0: i32, %arg1: memref<1xf32, #tpu.memory_space<smem>>, %arg2: memref<48x16xf32, #tpu.memory_space<vmem>>, %arg3: memref<48x64xf32, #tpu.memory_space<vmem>>, %arg4: memref<1x16x64xf32, #tpu.memory_space<vmem>>, %arg5: memref<1x64x64xf32, #tpu.memory_space<vmem>>, %arg6: memref<1x16x16xf32, #tpu.memory_space<vmem>>) attributes {dimension_semantics = [#tpu.dimension_semantics<parallel>], iteration_bounds = array<i64: 2>, scalar_prefetch = 0 : i64, scratch_operands = 0 : i64, tpu.core_type = #tpu.core_type<tc>, window_params = [{transform_indices = @transform_0, window_bounds = array<i64: 1>}, {pipeline_mode = #tpu.pipeline_mode<synchronous>, transform_indices = @transform_1, window_bounds = array<i64: 48, 16>}, {pipeline_mode = #tpu.pipeline_mode<synchronous>, transform_indices = @transform_2, window_bounds = array<i64: 48, 64>}, {transform_indices = @transform_3, window_bounds = array<i64: 1, 16, 64>}, {transform_indices = @transform_4, window_bounds = array<i64: 1, 64, 64>}, {transform_indices = @transform_5, window_bounds = array<i64: 1, 16, 16>}]} {
    %c0 = arith.constant 0 : index
    %c0_0 = arith.constant 0 : index
    %0 = vector.load %arg2[%c0, %c0_0] : memref<48x16xf32, #tpu.memory_space<vmem>>, vector<48x16xf32>
    %c0_1 = arith.constant 0 : index
    %c0_2 = arith.constant 0 : index
    %c0_3 = arith.constant 0 : index
    %1 = vector.load %arg4[%c0_1, %c0_2, %c0_3] : memref<1x16x64xf32, #tpu.memory_space<vmem>>, vector<1x16x64xf32>
    %2 = vector.shape_cast %1 : vector<1x16x64xf32> to vector<16x64xf32>
    %cst = arith.constant dense<0.000000e+00> : vector<48x64xf32>
    %3 = tpu.matmul %0, %2, %cst {dimension_numbers = #tpu.dot_dimension_numbers<[1], [0], [0], [1], [0, 0, 1, 1], [], []>} : vector<48x16xf32>, vector<16x64xf32>, vector<48x64xf32> -> vector<48x64xf32>
    %c0_4 = arith.constant 0 : index
    %c0_5 = arith.constant 0 : index
    %4 = vector.load %arg3[%c0_4, %c0_5] : memref<48x64xf32, #tpu.memory_space<vmem>>, vector<48x64xf32>
    %5 = arith.addf %3, %4 : vector<48x64xf32>
    %cst_6 = arith.constant 0.000000e+00 : f32
    %6 = vector.broadcast %cst_6 : f32 to vector<48x64xf32>
    %7 = arith.maximumf %5, %6 : vector<48x64xf32>
    %8 = vector.extract_strided_slice %7 {offsets = [0, 0], sizes = [16, 64], strides = [1, 1]} : vector<48x64xf32> to vector<16x64xf32>
    %9 = vector.extract_strided_slice %7 {offsets = [16, 0], sizes = [16, 64], strides = [1, 1]} : vector<48x64xf32> to vector<16x64xf32>
    %10 = vector.extract_strided_slice %7 {offsets = [32, 0], sizes = [16, 64], strides = [1, 1]} : vector<48x64xf32> to vector<16x64xf32>
    %cst_7 = arith.constant dense<0.000000e+00> : vector<16x16xf32>
    %11 = tpu.matmul %8, %9, %cst_7 {dimension_numbers = #tpu.dot_dimension_numbers<[1], [1], [0], [0], [0, 0, 1, 0], [], []>} : vector<16x64xf32>, vector<16x64xf32>, vector<16x16xf32> -> vector<16x16xf32>
    %cst_8 = arith.constant dense<0xFF800000> : vector<16xf32>
    %12 = vector.multi_reduction <maximumf>, %11, %cst_8 [0] : vector<16x16xf32> to vector<16xf32>
    %13 = vector.shape_cast %12 : vector<16xf32> to vector<1x16xf32>
    %14 = vector.broadcast %13 : vector<1x16xf32> to vector<16x16xf32>
    %15 = arith.subf %11, %14 : vector<16x16xf32>
    %16 = math.exp %15 : vector<16x16xf32>
    %cst_9 = arith.constant dense<0.000000e+00> : vector<16xf32>
    %17 = vector.multi_reduction <add>, %16, %cst_9 [0] : vector<16x16xf32> to vector<16xf32>
    %18 = vector.shape_cast %17 : vector<16xf32> to vector<1x16xf32>
    %19 = vector.broadcast %18 : vector<1x16xf32> to vector<16x16xf32>
    %20 = arith.divf %16, %19 : vector<16x16xf32>
    %c0_10 = arith.constant 0 : index
    %c0_11 = arith.constant 0 : index
    %c0_12 = arith.constant 0 : index
    %21 = vector.load %arg6[%c0_10, %c0_11, %c0_12] : memref<1x16x16xf32, #tpu.memory_space<vmem>>, vector<1x16x16xf32>
    %22 = vector.shape_cast %21 : vector<1x16x16xf32> to vector<16x16xf32>
    %23 = vector.shape_cast %20 : vector<16x16xf32> to vector<1x16x16xf32>
    tpu.vector_store %arg6[%c0_10, %c0_11, %c0_12], %23 {strides = array<i32>} : memref<1x16x16xf32, #tpu.memory_space<vmem>>, vector<1x16x16xf32>,
    %c0_13 = arith.constant 0 : index
    %24 = memref.load %arg1[%c0_13] : memref<1xf32, #tpu.memory_space<smem>>
    %25 = tpu.transpose %20, [1, 0] : vector<16x16xf32> -> vector<16x16xf32>
    %26 = vector.broadcast %24 : f32 to vector<16x16xf32>
    %27 = arith.mulf %25, %26 : vector<16x16xf32>
    %cst_14 = arith.constant dense<0.000000e+00> : vector<16x64xf32>
    %28 = tpu.matmul %27, %10, %cst_14 {dimension_numbers = #tpu.dot_dimension_numbers<[1], [0], [0], [1], [0, 0, 1, 1], [], []>} : vector<16x16xf32>, vector<16x64xf32>, vector<16x64xf32> -> vector<16x64xf32>
    %c0_15 = arith.constant 0 : index
    %c0_16 = arith.constant 0 : index
    %c0_17 = arith.constant 0 : index
    %29 = vector.load %arg5[%c0_15, %c0_16, %c0_17] : memref<1x64x64xf32, #tpu.memory_space<vmem>>, vector<1x48x64xf32>
    %30 = vector.shape_cast %29 : vector<1x48x64xf32> to vector<48x64xf32>
    %31 = vector.shape_cast %7 : vector<48x64xf32> to vector<1x48x64xf32>
    tpu.vector_store %arg5[%c0_15, %c0_16, %c0_17], %31 {strides = array<i32>} : memref<1x64x64xf32, #tpu.memory_space<vmem>>, vector<1x48x64xf32>,
    %c0_18 = arith.constant 0 : index
    %c48 = arith.constant 48 : index
    %c0_19 = arith.constant 0 : index
    %32 = vector.load %arg5[%c0_18, %c48, %c0_19] : memref<1x64x64xf32, #tpu.memory_space<vmem>>, vector<1x16x64xf32>
    %33 = vector.shape_cast %32 : vector<1x16x64xf32> to vector<16x64xf32>
    %34 = vector.shape_cast %28 : vector<16x64xf32> to vector<1x16x64xf32>
    tpu.vector_store %arg5[%c0_18, %c48, %c0_19], %34 {strides = array<i32>} : memref<1x64x64xf32, #tpu.memory_space<vmem>>, vector<1x16x64xf32>,
    return
  }
  func.func @transform_0(%arg0: i32) -> i32 {
    %c0_i32 = arith.constant 0 : i32
    %c0_i32_0 = arith.constant 0 : i32
    return %c0_i32 : i32
  }
  func.func @transform_1(%arg0: i32) -> (i32, i32) {
    %c0_i32 = arith.constant 0 : i32
    %c0_i32_0 = arith.constant 0 : i32
    %c0_i32_1 = arith.constant 0 : i32
    return %c0_i32, %c0_i32_0 : i32, i32
  }
  func.func @transform_2(%arg0: i32) -> (i32, i32) {
    %c0_i32 = arith.constant 0 : i32
    %c0_i32_0 = arith.constant 0 : i32
    %c0_i32_1 = arith.constant 0 : i32
    return %c0_i32, %c0_i32_0 : i32, i32
  }
  func.func @transform_3(%arg0: i32) -> (i32, i32, i32) {
    %c0_i32 = arith.constant 0 : i32
    %c0_i32_0 = arith.constant 0 : i32
    %c0_i32_1 = arith.constant 0 : i32
    return %arg0, %c0_i32, %c0_i32_0 : i32, i32, i32
  }
  func.func @transform_4(%arg0: i32) -> (i32, i32, i32) {
    %c0_i32 = arith.constant 0 : i32
    %c0_i32_0 = arith.constant 0 : i32
    %c0_i32_1 = arith.constant 0 : i32
    return %arg0, %c0_i32, %c0_i32_0 : i32, i32, i32
  }
  func.func @transform_5(%arg0: i32) -> (i32, i32, i32) {
    %c0_i32 = arith.constant 0 : i32
    %c0_i32_0 = arith.constant 0 : i32
    %c0_i32_1 = arith.constant 0 : i32
    return %arg0, %c0_i32, %c0_i32_0 : i32, i32, i32
  }
}

</mosaic_0001>

<llo_original>
// kernel: axis_portrait_attention.1
$region0: #{axis_portrait_attention.1}
  #allocation0 [shape = 'u32[]', space=smem, size = 0x4, offset = 0x4, fixed_abs, tag = 'smem constant byte address 0x4 - core index']
  #allocation1 [shape = 'u32[144,128]{1,0:T(1,128)}', space=vmem, size = 0x12000, scoped, tag = 'internal scratch']
  #allocation2 [shape = 'f32[1]{0:T(128)S(6)}', space=smem, size = 0x200, scoped, tag = 'scoped memory for axis_portrait_attention.1']
  %s0 = inlined_call_operand.<no memory space> [shape: f32[1], index: 0, kind: input, shape index: {}]
  %s1 = inlined_call_operand.vmem [shape: f32[48,16], index: 1, kind: input, shape index: {}]
  %s2 = inlined_call_operand.vmem [shape: f32[48,64], index: 2, kind: input, shape index: {}]
  %s3 = inlined_call_operand.vmem [shape: f32[2,16,64], index: 3, kind: input, shape index: {}]
  %s4 = inlined_call_operand.vmem [shape: f32[2,64,64], index: 4, kind: output, shape index: {0}]
  %s5 = inlined_call_operand.hbm [shape: f32[2,16,16], index: 5, kind: output, shape index: {1}]
  %6 = xla_tuple %s4, %s5
  %s7 = sld [smem:[#allocation0]]
  $region57: #{axis_portrait_attention.1} parent=0
    _
  %s9 = ssub.s32 1, %s7
  %s10 = scalar_select 0, %s9, %s7
  %11 = sst [smem:[#allocation2]] %s0
  $region1: #{axis_portrait_attention.1} parent=0
    #allocation3 [shape = 'u8[16384]{0}', space=vmem, size = 0x4000, scoped, tag = 'output window, operand 1']
    #allocation4 [shape = 's32[2]{0}', space=sflag, size = 0x8, scoped, tag = 'scoped memory for axis_portrait_attention.1']
    %12 = vsyncpa [#allocation4], 0
    %s13 = scalar_lea.sflag [#allocation4], 1
    %14 = vsyncpa %s13, 0
    loop: start=0, step=1, limit=4
    $region2: #{axis_portrait_attention.1} parent=1 // loop_pre_header
      _
    $region3: #{axis_portrait_attention.1} parent=1 // loop_header
      %s16 = sphi 0, %s20
      %p17 = scmp.ge.s32.totalorder %s16, 4
      %s24 = sphi 0, %s24
      %s26 = sphi 0, %s24
      %s27 = sphi 0, %s26
      %s41 = sphi 0, %s27
      %s45 = sphi 0, %s45
      %s47 = sphi 0, %s45
      %s48 = sphi 0, %s47
      %s62 = sphi 0, %s48
      %s66 = sphi 0, %s66
      %s68 = sphi 0, %s66
      %s69 = sphi 0, %s68
      %s83 = sphi 0, %s69
      %s89 = sphi 0, %s91
      %s92 = sphi 0, %s89
      %s93 = sphi 0, %s92
      %s109 = sphi 0, %s93
      %s115 = sphi 0, %s117
      %s118 = sphi 0, %s115
      %s119 = sphi 0, %s118
      %s135 = sphi 0, %s119
      %s141 = sphi 0, %s143
      %s144 = sphi 0, %s141
      %s145 = sphi 0, %s144
      %s161 = sphi 0, %s145
    $region4: #{axis_portrait_attention.1} parent=1 // loop_header_branch
      %19 = sbr.rel (%p17) target = $region8
    $region5: #{axis_portrait_attention.1} parent=1 // loop_body
      %s21 = ssub.s32 %s16, 1
      %s22 = ssub.s32 %s16, 2
      %s23 = sadd.s32 %s16, 1
      %s25 = sadd.s32 %s24, 1
      %p28 = scmp.eq.s32.totalorder %s16, 1
      %p29 = scmp.ne.s32.totalorder %s24, %s26
      %p30 = scmp.eq.s32.totalorder %s16, 0
      %p31 = por %p29, %p30
      %p32 = scmp.ne.s32.totalorder %s24, %s26
      %p33 = scmp.eq.s32.totalorder %s21, 1
      %p34 = por %p32, %p33
      %p35 = scmp.ne.s32.totalorder %s26, %s27
      %p36 = scmp.eq.s32.totalorder %s21, 0
      %p37 = por %p35, %p36
      %p38 = scmp.ne.s32.totalorder %s26, %s27
      %p39 = scmp.eq.s32.totalorder %s22, 1
      %p40 = por %p38, %p39
      %p42 = scmp.ne.s32.totalorder %s27, %s41
      %p43 = scmp.eq.s32.totalorder %s22, 0
      %p44 = por %p42, %p43
      %s46 = sadd.s32 %s45, 1
      %p49 = scmp.eq.s32.totalorder %s16, 1
      %p50 = scmp.ne.s32.totalorder %s45, %s47
      %p51 = scmp.eq.s32.totalorder %s16, 0
      %p52 = por %p50, %p51
      %p53 = scmp.ne.s32.totalorder %s45, %s47
      %p54 = scmp.eq.s32.totalorder %s21, 1
      %p55 = por %p53, %p54
      %p56 = scmp.ne.s32.totalorder %s47, %s48
      %p57 = scmp.eq.s32.totalorder %s21, 0
      %p58 = por %p56, %p57
      %p59 = scmp.ne.s32.totalorder %s47, %s48
      %p60 = scmp.eq.s32.totalorder %s22, 1
      %p61 = por %p59, %p60
      %p63 = scmp.ne.s32.totalorder %s48, %s62
      %p64 = scmp.eq.s32.totalorder %s22, 0
      %p65 = por %p63, %p64
      %s67 = sadd.s32 %s66, 1
      %p70 = scmp.eq.s32.totalorder %s16, 1
      %p71 = scmp.ne.s32.totalorder %s66, %s68
      %p72 = scmp.eq.s32.totalorder %s16, 0
      %p73 = por %p71, %p72
      %p74 = scmp.ne.s32.totalorder %s66, %s68
      %p75 = scmp.eq.s32.totalorder %s21, 1
      %p76 = por %p74, %p75
      %p77 = scmp.ne.s32.totalorder %s68, %s69
      %p78 = scmp.eq.s32.totalorder %s21, 0
      %p79 = por %p77, %p78
      %p80 = scmp.ne.s32.totalorder %s68, %s69
      %p81 = scmp.eq.s32.totalorder %s22, 1
      %p82 = por %p80, %p81
      %p84 = scmp.ne.s32.totalorder %s69, %s83
      %p85 = scmp.eq.s32.totalorder %s22, 0
      %p86 = por %p84, %p85
      %s87 = ssub.s32 %s16, %s23
      %p88 = scmp.eq.s32.totalorder %s87, 0
      %s90 = sadd.s32 %s89, 1
      %s91 = scalar_select %p88, %s89, %s90
      %p94 = pneg %p88
      %p95 = scmp.eq.s32.totalorder %s16, 1
      %p96 = por %p94, %p95
      %p97 = scmp.ne.s32.totalorder %s89, %s92
      %p98 = scmp.eq.s32.totalorder %s16, 0
      %p99 = por %p97, %p98
      %p100 = scmp.ne.s32.totalorder %s89, %s92
      %p101 = scmp.eq.s32.totalorder %s21, 1
      %p102 = por %p100, %p101
      %p103 = scmp.ne.s32.totalorder %s92, %s93
      %p104 = scmp.eq.s32.totalorder %s21, 0
      %p105 = por %p103, %p104
      %p106 = scmp.ne.s32.totalorder %s92, %s93
      %p107 = scmp.eq.s32.totalorder %s22, 1
      %p108 = por %p106, %p107
      %p110 = scmp.ne.s32.totalorder %s93, %s109
      %p111 = scmp.eq.s32.totalorder %s22, 0
      %p112 = por %p110, %p111
      %s113 = ssub.s32 %s16, %s23
      %p114 = scmp.eq.s32.totalorder %s113, 0
      %s116 = sadd.s32 %s115, 1
      %s117 = scalar_select %p114, %s115, %s116
      %p120 = pneg %p114
      %p121 = scmp.eq.s32.totalorder %s16, 1
      %p122 = por %p120, %p121
      %p123 = scmp.ne.s32.totalorder %s115, %s118
      %p124 = scmp.eq.s32.totalorder %s16, 0
      %p125 = por %p123, %p124
      %p126 = scmp.ne.s32.totalorder %s115, %s118
      %p127 = scmp.eq.s32.totalorder %s21, 1
      %p128 = por %p126, %p127
      %p129 = scmp.ne.s32.totalorder %s118, %s119
      %p130 = scmp.eq.s32.totalorder %s21, 0
      %p131 = por %p129, %p130
      %p132 = scmp.ne.s32.totalorder %s118, %s119
      %p133 = scmp.eq.s32.totalorder %s22, 1
      %p134 = por %p132, %p133
      %p136 = scmp.ne.s32.totalorder %s119, %s135
      %p137 = scmp.eq.s32.totalorder %s22, 0
      %p138 = por %p136, %p137
      %s139 = ssub.s32 %s16, %s23
      %p140 = scmp.eq.s32.totalorder %s139, 0
      %s142 = sadd.s32 %s141, 1
      %s143 = scalar_select %p140, %s141, %s142
      %p146 = pneg %p140
      %p147 = scmp.eq.s32.totalorder %s16, 1
      %p148 = por %p146, %p147
      %p149 = scmp.ne.s32.totalorder %s141, %s144
      %p150 = scmp.eq.s32.totalorder %s16, 0
      %p151 = por %p149, %p150
      %p152 = scmp.ne.s32.totalorder %s141, %s144
      %p153 = scmp.eq.s32.totalorder %s21, 1
      %p154 = por %p152, %p153
      %p155 = scmp.ne.s32.totalorder %s144, %s145
      %p156 = scmp.eq.s32.totalorder %s21, 0
      %p157 = por %p155, %p156
      %p158 = scmp.ne.s32.totalorder %s144, %s145
      %p159 = scmp.eq.s32.totalorder %s22, 1
      %p160 = por %p158, %p159
      %p162 = scmp.ne.s32.totalorder %s145, %s161
      %p163 = scmp.eq.s32.totalorder %s22, 0
      %p164 = por %p162, %p163
      %p165 = scmp.le.s32.totalorder 1, %s16
      %p166 = scmp.lt.s32.totalorder %s16, 3
      %p167 = pnand %p165, %p166
      %p168 = pneg %p167
      // Predicated region
      $region9: #{axis_portrait_attention.1} parent=5 // pred_check
        _
      $region10: #{axis_portrait_attention.1} parent=5 // pred_check_branch
        %170 = sbr.rel (%p167) target = $region12
      $region11: #{axis_portrait_attention.1} parent=5 // pred_region
        %s171 = ssub.s32 %s16, 1
        // Predicated region
        $region13: #{axis_portrait_attention.1} parent=11 // pred_check
          %p172 = pneg %p37
        $region14: #{axis_portrait_attention.1} parent=11 // pred_check_branch
          %174 = sbr.rel (%p172) target = $region16
        $region15: #{axis_portrait_attention.1} parent=11 // pred_region
          _
        $region16: #{axis_portrait_attention.1} parent=11 // pred_fallthru
          _
        // Predicated region
        $region17: #{axis_portrait_attention.1} parent=11 // pred_check
          %p175 = pneg %p58
        $region18: #{axis_portrait_attention.1} parent=11 // pred_check_branch
          %177 = sbr.rel (%p175) target = $region20
        $region19: #{axis_portrait_attention.1} parent=11 // pred_region
          _
        $region20: #{axis_portrait_attention.1} parent=11 // pred_fallthru
          _
        // Predicated region
        $region21: #{axis_portrait_attention.1} parent=11 // pred_check
          %p178 = pneg %p79
        $region22: #{axis_portrait_attention.1} parent=11 // pred_check_branch
          %180 = sbr.rel (%p178) target = $region24
        $region23: #{axis_portrait_attention.1} parent=11 // pred_region
          _
        $region24: #{axis_portrait_attention.1} parent=11 // pred_fallthru
          _
      $region12: #{axis_portrait_attention.1} parent=5 // pred_fallthru
        _
      %p181 = scmp.lt.s32.totalorder %s16, 2
      // Predicated region
      $region25: #{axis_portrait_attention.1} parent=5 // pred_check
        %p182 = pneg %p181
      $region26: #{axis_portrait_attention.1} parent=5 // pred_check_branch
        %184 = sbr.rel (%p182) target = $region28
      $region27: #{axis_portrait_attention.1} parent=5 // pred_region
        // Predicated region
        $region29: #{axis_portrait_attention.1} parent=27 // pred_check
          %p185 = pneg %p99
        $region30: #{axis_portrait_attention.1} parent=27 // pred_check_branch
          %187 = sbr.rel (%p185) target = $region32
        $region31: #{axis_portrait_attention.1} parent=27 // pred_region
          %p188 = scmp.lt.s32.totalorder %s16, 1
          %s189 = scalar_select %p188, %s16, 1
          %s190 = smul.addr %s189, 2
          %s191 = smul.addr %s190, 8
          %s192 = scalar_lea.vmem %s3, %s191
        $region32: #{axis_portrait_attention.1} parent=27 // pred_fallthru
          _
      $region28: #{axis_portrait_attention.1} parent=5 // pred_fallthru
        _
      %p193 = scmp.le.s32.totalorder 1, %s16
      %p194 = scmp.lt.s32.totalorder %s16, 3
      %p195 = pnand %p193, %p194
      %p196 = pneg %p195
      // Predicated region
      $region33: #{axis_portrait_attention.1} parent=5 // pred_check
        _
      $region34: #{axis_portrait_attention.1} parent=5 // pred_check_branch
        %198 = sbr.rel (%p195) target = $region36
      $region35: #{axis_portrait_attention.1} parent=5 // pred_region
        %s199 = ssub.s32 %s16, 1
        %p200 = pneg %p37
        %p201 = pneg %p34
        %p202 = pneg %p58
        %p203 = pneg %p55
        %p204 = pneg %p79
        %p205 = pneg %p76
        %p206 = scmp.lt.s32.totalorder %s21, 1
        %s207 = scalar_select %p206, %s21, 1
        %s208 = smul.addr %s207, 2
        %s209 = smul.addr %s208, 8
        %s210 = scalar_lea.vmem %s3, %s209
        %p211 = pneg %p105
        %p212 = pneg %p102
        %p213 = pneg %p131
        %p214 = pneg %p128
        %p215 = scmp.lt.s32.totalorder %s21, 1
        %s216 = scalar_select %p215, %s21, 1
        %s217 = smul.addr %s216, 8
        %s218 = smul.addr %s217, 8
        %s219 = scalar_lea.vmem %s4, %s218
        %p220 = pneg %p157
        %p221 = pneg %p154
        %s222 = sand.u32 %s144, 1
        %s223 = scalar_lea.sflag [#allocation4], %s222
        %s224 = sand.u32 %s144, 1
        %s225 = smul.addr %s224, 16
        %s226 = scalar_lea.vmem [#allocation3], %s225
        %p227 = scmp.lt.s32.totalorder %s21, 1
        %s228 = scalar_select %p227, %s21, 1
        %s229 = smul.addr %s228, 2
        %s230 = smul.addr %s229, 8
        %s231 = scalar_lea.vmem %s3, %s230
        %p232 = scmp.lt.s32.totalorder %s21, 1
        %s233 = scalar_select %p232, %s21, 1
        %s234 = smul.addr %s233, 8
        %s235 = smul.addr %s234, 8
        %s236 = scalar_lea.vmem %s4, %s235
        %v237 = vld [vmem:[%s1] sm:$0xff]
        %v238 = vld [vmem:[%s1 + $0x8] sm:$0xff]
        %v239 = vld [vmem:[%s1 + $0x10] sm:$0xff]
        %v240 = vld [vmem:[%s1 + $0x18] sm:$0xff]
        %v241 = vld [vmem:[%s1 + $0x20] sm:$0xff]
        %v242 = vld [vmem:[%s1 + $0x28] sm:$0xff]
        %v243 = vld [vmem:[%s231] sm:$0xff]
        %v244 = vld [vmem:[%s231 + $0x8] sm:$0xff]
        %v245 = vld [vmem:[%s2] sm:$0xff]
        %v246 = vld [vmem:[%s2 + $0x8] sm:$0xff]
        %v247 = vld [vmem:[%s2 + $0x10] sm:$0xff]
        %v248 = vld [vmem:[%s2 + $0x18] sm:$0xff]
        %v249 = vld [vmem:[%s2 + $0x20] sm:$0xff]
        %v250 = vld [vmem:[%s2 + $0x28] sm:$0xff]
        %vm251 = vcmask 130048
        %v253 = vsel %vm251, %v237, 0
        %v256 = vsel %vm251, %v238, 0
        %v259 = vsel %vm251, %v239, 0
        %v262 = vsel %vm251, %v240, 0
        %v265 = vsel %vm251, %v241, 0
        %v268 = vsel %vm251, %v242, 0
        %270 = vmatprep.subr.mxu0 0.0
        %271 = vmatpush1.msra.mxu0 %v243
        %272 = vmatprep.subr.mxu0 0.0
        %273 = vmatpush1.msra.mxu0 %v244
        %274 = vmatprep.subr.mxu0 0.0
        %275 = vmatpush1.msra.mxu0 0.0
        %276 = vmatprep.subr.mxu0 0.0
        %277 = vmatpush1.msra.mxu0 0.0
        %278 = vmatprep.subr.mxu0 0.0
        %279 = vmatpush1.msra.mxu0 0.0
        %280 = vmatprep.subr.mxu0 0.0
        %281 = vmatpush1.msra.mxu0 0.0
        %282 = vmatprep.subr.mxu0 0.0
        %283 = vmatpush1.msra.mxu0 0.0
        %284 = vmatprep.subr.mxu0 0.0
        %285 = vmatpush1.msra.mxu0 0.0
        %286 = vmatprep.subr.mxu0 0.0
        %287 = vmatpush1.msra.mxu0 0.0
        %288 = vmatprep.subr.mxu0 0.0
        %289 = vmatpush1.msra.mxu0 0.0
        %290 = vmatprep.subr.mxu0 0.0
        %291 = vmatpush1.msra.mxu0 0.0
        %292 = vmatprep.subr.mxu0 0.0
        %293 = vmatpush1.msra.mxu0 0.0
        %294 = vmatprep.subr.mxu0 0.0
        %295 = vmatpush1.msra.mxu0 0.0
        %296 = vmatprep.subr.mxu0 0.0
        %297 = vmatpush1.msra.mxu0 0.0
        %298 = vmatprep.subr.mxu0 0.0
        %299 = vmatpush1.msra.mxu0 0.0
        %300 = vmatprep.subr.mxu0 0.0
        %301 = vmatpush1.msra.mxu0 0.0
        %302 = vmatprep.subr.mxu0 0.0
        %303 = vmatpush1.msra.mxu0 0.0
        %304 = vmatprep.subr.mxu0 0.0
        %305 = vmatpush1.msra.mxu0 0.0
        %306 = vmatprep.subr.mxu0 0.0
        %307 = vmatpush1.msra.mxu0 0.0
        %308 = vmatprep.subr.mxu0 0.0
        %309 = vmatpush1.msra.mxu0 0.0
        %310 = vmatprep.subr.mxu0 0.0
        %311 = vmatpush1.msra.mxu0 0.0
        %312 = vmatprep.subr.mxu0 0.0
        %313 = vmatpush1.msra.mxu0 0.0
        %314 = vmatprep.subr.mxu0 0.0
        %315 = vmatpush1.msra.mxu0 0.0
        %316 = vmatprep.subr.mxu0 0.0
        %317 = vmatpush1.msra.mxu0 0.0
        %318 = vmatprep.subr.mxu0 0.0
        %319 = vmatpush1.msra.mxu0 0.0
        %320 = vmatprep.subr.mxu0 0.0
        %321 = vmatpush1.msra.mxu0 0.0
        %322 = vmatprep.subr.mxu0 0.0
        %323 = vmatpush1.msra.mxu0 0.0
        %324 = vmatprep.subr.mxu0 0.0
        %325 = vmatpush1.msra.mxu0 0.0
        %326 = vmatprep.subr.mxu0 0.0
        %327 = vmatpush1.msra.mxu0 0.0
        %328 = vmatprep.subr.mxu0 0.0
        %329 = vmatpush1.msra.mxu0 0.0
        %330 = vmatprep.subr.mxu0 0.0
        %331 = vmatpush1.msra.mxu0 0.0
        %332 = vmatprep.subr.mxu0 0.0
        %333 = vmatpush1.msra.mxu0 0.0
        %334 = vmatprep.mubr.f32.mxu0 0.0
        %335 = vmatmul.mubr.f32.gmra.mrb[0].mxu0 %v253
        %v336 = vpop.f32.mrb[0].mxu0
        %v337 = vadd.f32 %v245, %v336
        %v338 = vpop.f32.mrb[0].mxu0
        %339 = vmatprep.mubr.f32.mxu0 0.0
        %340 = vmatmul.mubr.f32.gmra.mrb[0].mxu0 %v256
        %v341 = vpop.f32.mrb[0].mxu0
        %v342 = vadd.f32 %v246, %v341
        %v343 = vpop.f32.mrb[0].mxu0
        %344 = vmatprep.mubr.f32.mxu0 0.0
        %345 = vmatmul.mubr.f32.gmra.mrb[0].mxu0 %v259
        %v346 = vpop.f32.mrb[0].mxu0
        %v347 = vadd.f32 %v247, %v346
        %v348 = vpop.f32.mrb[0].mxu0
        %349 = vmatprep.mubr.f32.mxu0 0.0
        %350 = vmatmul.mubr.f32.gmra.mrb[0].mxu0 %v262
        %v351 = vpop.f32.mrb[0].mxu0
        %v352 = vadd.f32 %v248, %v351
        %v353 = vpop.f32.mrb[0].mxu0
        %354 = vmatprep.mubr.f32.mxu0 0.0
        %355 = vmatmul.mubr.f32.gmra.mrb[0].mxu0 %v265
        %v356 = vpop.f32.mrb[0].mxu0
        %v357 = vadd.f32 %v249, %v356
        %v358 = vpop.f32.mrb[0].mxu0
        %359 = vmatprep.mubr.f32.mxu0 0.0
        %360 = vmatmul.mubr.f32.gmra.mrb[0].mxu0 %v268
        %v361 = vpop.f32.mrb[0].mxu0
        %v362 = vadd.f32 %v250, %v361
        %v363 = vpop.f32.mrb[0].mxu0
        %364 = vdwg.mxu0
        %v365 = vmax.f32 %v337, 0.0
        %v366 = vmax.f32 %v342, 0.0
        %v367 = vmax.f32 %v347, 0.0
        %v368 = vmax.f32 %v352, 0.0
        %v369 = vmax.f32 %v357, 0.0
        %v370 = vmax.f32 %v362, 0.0
        %vm371 = vcmask 523264
        %v373 = vsel %vm371, %v365, 0
        %v376 = vsel %vm371, %v366, 0
        %v379 = vsel %vm371, %v367, 0
        %v382 = vsel %vm371, %v368, 0
        %384 = vmatprep.subr.mxu0 0.0
        %385 = vmatpush1.xpose.msra.mxu0 %v379
        %386 = vmatprep.subr.mxu0 0.0
        %387 = vmatpush1.xpose.msra.mxu0 %v382
        %388 = vmatprep.subr.mxu0 0.0
        %389 = vmatpush1.xpose.msra.mxu0 0.0
        %390 = vmatprep.subr.mxu0 0.0
        %391 = vmatpush1.xpose.msra.mxu0 0.0
        %392 = vmatprep.subr.mxu0 0.0
        %393 = vmatpush1.xpose.msra.mxu0 0.0
        %394 = vmatprep.subr.mxu0 0.0
        %395 = vmatpush1.xpose.msra.mxu0 0.0
        %396 = vmatprep.subr.mxu0 0.0
        %397 = vmatpush1.xpose.msra.mxu0 0.0
        %398 = vmatprep.subr.mxu0 0.0
        %399 = vmatpush1.xpose.msra.mxu0 0.0
        %400 = vmatprep.subr.mxu0 0.0
        %401 = vmatpush1.xpose.msra.mxu0 0.0
        %402 = vmatprep.subr.mxu0 0.0
        %403 = vmatpush1.xpose.msra.mxu0 0.0
        %404 = vmatprep.subr.mxu0 0.0
        %405 = vmatpush1.xpose.msra.mxu0 0.0
        %406 = vmatprep.subr.mxu0 0.0
        %407 = vmatpush1.xpose.msra.mxu0 0.0
        %408 = vmatprep.subr.mxu0 0.0
        %409 = vmatpush1.xpose.msra.mxu0 0.0
        %410 = vmatprep.subr.mxu0 0.0
        %411 = vmatpush1.xpose.msra.mxu0 0.0
        %412 = vmatprep.subr.mxu0 0.0
        %413 = vmatpush1.xpose.msra.mxu0 0.0
        %414 = vmatprep.subr.mxu0 0.0
        %415 = vmatpush1.xpose.msra.mxu0 0.0
        %416 = vmatprep.subr.mxu0 0.0
        %417 = vmatpush1.xpose.msra.mxu0 0.0
        %418 = vmatprep.subr.mxu0 0.0
        %419 = vmatpush1.xpose.msra.mxu0 0.0
        %420 = vmatprep.subr.mxu0 0.0
        %421 = vmatpush1.xpose.msra.mxu0 0.0
        %422 = vmatprep.subr.mxu0 0.0
        %423 = vmatpush1.xpose.msra.mxu0 0.0
        %424 = vmatprep.subr.mxu0 0.0
        %425 = vmatpush1.xpose.msra.mxu0 0.0
        %426 = vmatprep.subr.mxu0 0.0
        %427 = vmatpush1.xpose.msra.mxu0 0.0
        %428 = vmatprep.subr.mxu0 0.0
        %429 = vmatpush1.xpose.msra.mxu0 0.0
        %430 = vmatprep.subr.mxu0 0.0
        %431 = vmatpush1.xpose.msra.mxu0 0.0
        %432 = vmatprep.subr.mxu0 0.0
        %433 = vmatpush1.xpose.msra.mxu0 0.0
        %434 = vmatprep.subr.mxu0 0.0
        %435 = vmatpush1.xpose.msra.mxu0 0.0
        %436 = vmatprep.subr.mxu0 0.0
        %437 = vmatpush1.xpose.msra.mxu0 0.0
        %438 = vmatprep.subr.mxu0 0.0
        %439 = vmatpush1.xpose.msra.mxu0 0.0
        %440 = vmatprep.subr.mxu0 0.0
        %441 = vmatpush1.xpose.msra.mxu0 0.0
        %442 = vmatprep.subr.mxu0 0.0
        %443 = vmatpush1.xpose.msra.mxu0 0.0
        %444 = vmatprep.subr.mxu0 0.0
        %445 = vmatpush1.xpose.msra.mxu0 0.0
        %446 = vmatprep.subr.mxu0 0.0
        %447 = vmatpush1.xpose.msra.mxu0 0.0
        %448 = vmatprep.mubr.f32.mxu0 0.0
        %449 = vmatmul.mubr.f32.gmra.mrb[0].mxu0 %v373
        %v450 = vpop.f32.mrb[0].mxu0
        %v451 = vadd.f32 0.0, %v450
        %v452 = vpop.f32.mrb[0].mxu0
        %453 = vmatprep.mubr.f32.mxu0 0.0
        %454 = vmatmul.mubr.f32.gmra.mrb[0].mxu0 %v376
        %v455 = vpop.f32.mrb[0].mxu0
        %v456 = vadd.f32 0.0, %v455
        %v457 = vpop.f32.mrb[0].mxu0
        %458 = vdwg.mxu0
        %v459 = vsel %vm251, %v451, -inf
        %v460 = vsel %vm251, %v456, -inf
        %v461 = vmax.f32 %v459, %v460
        %v462 = vrot.slane %v461, 4
        %v463 = vmax.f32 %v461, %v462
        %v464 = vrot.slane %v463, 2
        %v465 = vmax.f32 %v463, %v464
        %v466 = vrot.slane %v465, 1
        %v467 = vmax.f32 %v465, %v466
        %v468 = vsub.f32 %v451, %v467
        %v469 = vsub.f32 %v456, %v467
        %v470 = vmul.f32 %v468, 1.442695
        %v471 = vpow.pop %v470
        %v472 = vmul.f32 %v469, 1.442695
        %v473 = vpow.pop %v472
        %v474 = vsel %vm251, %v471, 0.0
        %v475 = vsel %vm251, %v473, 0.0
        %v476 = vadd.f32 %v474, %v475
        %v477 = vrot.slane %v476, 4
        %v478 = vadd.f32 %v476, %v477
        %v479 = vrot.slane %v478, 2
        %v480 = vadd.f32 %v478, %v479
        %v481 = vrot.slane %v480, 1
        %v482 = vadd.f32 %v480, %v481
        %v483 = vrcp.pop %v482
        %v484 = vmul.f32 %v471, %v483
        %v485 = vmul.f32 %v473, %v483
        %486 = vst.msk [vmem:[%s226] sm:$0xff] %vm251, %v484
        %487 = vst.msk [vmem:[%s226 + $0x8] sm:$0xff] %vm251, %v485
        %s488 = sld [smem:[#allocation2]]
        %489 = vxpose.xlu0.b32.start [1/16] %v484, 128
        %490 = vxpose.xlu0.b32.cont [2/16] %v485, 128
        %491 = vxpose.xlu0.b32.cont [3/16] 0.0, 128
        %492 = vxpose.xlu0.b32.cont [4/16] 0.0, 128
        %493 = vxpose.xlu0.b32.cont [5/16] 0.0, 128
        %494 = vxpose.xlu0.b32.cont [6/16] 0.0, 128
        %495 = vxpose.xlu0.b32.cont [7/16] 0.0, 128
        %496 = vxpose.xlu0.b32.cont [8/16] 0.0, 128
        %497 = vxpose.xlu0.b32.cont [9/16] 0.0, 128
        %498 = vxpose.xlu0.b32.cont [10/16] 0.0, 128
        %499 = vxpose.xlu0.b32.cont [11/16] 0.0, 128
        %500 = vxpose.xlu0.b32.cont [12/16] 0.0, 128
        %501 = vxpose.xlu0.b32.cont [13/16] 0.0, 128
        %502 = vxpose.xlu0.b32.cont [14/16] 0.0, 128
        %503 = vxpose.xlu0.b32.cont [15/16] 0.0, 128
        %504 = vxpose.xlu0.b32.end [16/16] 0.0, 128
        %v505 = vpop.trf.xlu0
        %v506 = vpop.trf.xlu0
        %v507 = vpop.trf.xlu0
        %v508 = vpop.trf.xlu0
        %v509 = vpop.trf.xlu0
        %v510 = vpop.trf.xlu0
        %v511 = vpop.trf.xlu0
        %v512 = vpop.trf.xlu0
        %v513 = vpop.trf.xlu0
        %v514 = vpop.trf.xlu0
        %v515 = vpop.trf.xlu0
        %v516 = vpop.trf.xlu0
        %v517 = vpop.trf.xlu0
        %v518 = vpop.trf.xlu0
        %v519 = vpop.trf.xlu0
        %v520 = vpop.trf.xlu0
        %v521 = vstv %s488
        %v522 = vmul.f32 %v505, %v521
        %v523 = vmul.f32 %v506, %v521
        %v525 = vsel %vm251, %v522, 0
        %v528 = vsel %vm251, %v523, 0
        %530 = vmatprep.subr.mxu0 0.0
        %531 = vmatpush1.msra.mxu0 %v369
        %532 = vmatprep.subr.mxu0 0.0
        %533 = vmatpush1.msra.mxu0 %v370
        %534 = vmatprep.subr.mxu0 0.0
        %535 = vmatpush1.msra.mxu0 0.0
        %536 = vmatprep.subr.mxu0 0.0
        %537 = vmatpush1.msra.mxu0 0.0
        %538 = vmatprep.subr.mxu0 0.0
        %539 = vmatpush1.msra.mxu0 0.0
        %540 = vmatprep.subr.mxu0 0.0
        %541 = vmatpush1.msra.mxu0 0.0
        %542 = vmatprep.subr.mxu0 0.0
        %543 = vmatpush1.msra.mxu0 0.0
        %544 = vmatprep.subr.mxu0 0.0
        %545 = vmatpush1.msra.mxu0 0.0
        %546 = vmatprep.subr.mxu0 0.0
        %547 = vmatpush1.msra.mxu0 0.0
        %548 = vmatprep.subr.mxu0 0.0
        %549 = vmatpush1.msra.mxu0 0.0
        %550 = vmatprep.subr.mxu0 0.0
        %551 = vmatpush1.msra.mxu0 0.0
        %552 = vmatprep.subr.mxu0 0.0
        %553 = vmatpush1.msra.mxu0 0.0
        %554 = vmatprep.subr.mxu0 0.0
        %555 = vmatpush1.msra.mxu0 0.0
        %556 = vmatprep.subr.mxu0 0.0
        %557 = vmatpush1.msra.mxu0 0.0
        %558 = vmatprep.subr.mxu0 0.0
        %559 = vmatpush1.msra.mxu0 0.0
        %560 = vmatprep.subr.mxu0 0.0
        %561 = vmatpush1.msra.mxu0 0.0
        %562 = vmatprep.subr.mxu0 0.0
        %563 = vmatpush1.msra.mxu0 0.0
        %564 = vmatprep.subr.mxu0 0.0
        %565 = vmatpush1.msra.mxu0 0.0
        %566 = vmatprep.subr.mxu0 0.0
        %567 = vmatpush1.msra.mxu0 0.0
        %568 = vmatprep.subr.mxu0 0.0
        %569 = vmatpush1.msra.mxu0 0.0
        %570 = vmatprep.subr.mxu0 0.0
        %571 = vmatpush1.msra.mxu0 0.0
        %572 = vmatprep.subr.mxu0 0.0
        %573 = vmatpush1.msra.mxu0 0.0
        %574 = vmatprep.subr.mxu0 0.0
        %575 = vmatpush1.msra.mxu0 0.0
        %576 = vmatprep.subr.mxu0 0.0
        %577 = vmatpush1.msra.mxu0 0.0
        %578 = vmatprep.subr.mxu0 0.0
        %579 = vmatpush1.msra.mxu0 0.0
        %580 = vmatprep.subr.mxu0 0.0
        %581 = vmatpush1.msra.mxu0 0.0
        %582 = vmatprep.subr.mxu0 0.0
        %583 = vmatpush1.msra.mxu0 0.0
        %584 = vmatprep.subr.mxu0 0.0
        %585 = vmatpush1.msra.mxu0 0.0
        %586 = vmatprep.subr.mxu0 0.0
        %587 = vmatpush1.msra.mxu0 0.0
        %588 = vmatprep.subr.mxu0 0.0
        %589 = vmatpush1.msra.mxu0 0.0
        %590 = vmatprep.subr.mxu0 0.0
        %591 = vmatpush1.msra.mxu0 0.0
        %592 = vmatprep.subr.mxu0 0.0
        %593 = vmatpush1.msra.mxu0 0.0
        %594 = vmatprep.mubr.f32.mxu0 0.0
        %595 = vmatmul.mubr.f32.gmra.mrb[0].mxu0 %v525
        %v596 = vpop.f32.mrb[0].mxu0
        %v597 = vadd.f32 0.0, %v596
        %v598 = vpop.f32.mrb[0].mxu0
        %599 = vmatprep.mubr.f32.mxu0 0.0
        %600 = vmatmul.mubr.f32.gmra.mrb[0].mxu0 %v528
        %v601 = vpop.f32.mrb[0].mxu0
        %v602 = vadd.f32 0.0, %v601
        %v603 = vpop.f32.mrb[0].mxu0
        %604 = vdwg.mxu0
        %605 = vst.msk [vmem:[%s236] sm:$0xff] %vm371, %v365
        %606 = vst.msk [vmem:[%s236 + $0x8] sm:$0xff] %vm371, %v366
        %607 = vst.msk [vmem:[%s236 + $0x10] sm:$0xff] %vm371, %v367
        %608 = vst.msk [vmem:[%s236 + $0x18] sm:$0xff] %vm371, %v368
        %609 = vst.msk [vmem:[%s236 + $0x20] sm:$0xff] %vm371, %v369
        %610 = vst.msk [vmem:[%s236 + $0x28] sm:$0xff] %vm371, %v370
        %611 = vst.msk [vmem:[%s236 + $0x30] sm:$0xff] %vm371, %v597
        %612 = vst.msk [vmem:[%s236 + $0x38] sm:$0xff] %vm371, %v602
        %p613 = scmp.lt.s32.totalorder %s21, 1
        %s614 = scalar_select %p613, %s21, 1
        %s615 = smul.addr %s614, 8
        %s616 = smul.addr %s615, 8
        %s617 = scalar_lea.vmem %s4, %s616
        %s618 = sand.u32 %s144, 1
        %s619 = scalar_lea.sflag [#allocation4], %s618
        %s620 = sand.u32 %s144, 1
        %s621 = smul.addr %s620, 16
        %s622 = scalar_lea.vmem [#allocation3], %s621
        // Predicated region
        $region37: #{axis_portrait_attention.1} parent=35 // pred_check
          %p623 = pneg %p128
        $region38: #{axis_portrait_attention.1} parent=35 // pred_check_branch
          %625 = sbr.rel (%p623) target = $region40
        $region39: #{axis_portrait_attention.1} parent=35 // pred_region
          _
        $region40: #{axis_portrait_attention.1} parent=35 // pred_fallthru
          _
        // Predicated region
        $region41: #{axis_portrait_attention.1} parent=35 // pred_check
          %p626 = pneg %p154
        $region42: #{axis_portrait_attention.1} parent=35 // pred_check_branch
          %628 = sbr.rel (%p626) target = $region44
        $region43: #{axis_portrait_attention.1} parent=35 // pred_region
          %s630 = ssub.s32 256, 256
          %631 = vsyncadd %s619, %s630
          %s632 = smul.addr %s21, 2
          %s633 = smul.addr %s632, 128
          %s634 = scalar_lea.hbm %s5, %s633
          %s635 = sshll.u32 %s622, 4
          %s636 = int_to_ptr.vmem [resolvable:$true] %s635
          %641 = dma.vmem_to_hbm [thread:$0]  %s636, 256, %s634, %s619, 128, 128, 8
        $region44: #{axis_portrait_attention.1} parent=35 // pred_fallthru
          _
      $region36: #{axis_portrait_attention.1} parent=5 // pred_fallthru
        _
      %p642 = scmp.le.s32.totalorder 2, %s16
      // Predicated region
      $region45: #{axis_portrait_attention.1} parent=5 // pred_check
        %p643 = pneg %p642
      $region46: #{axis_portrait_attention.1} parent=5 // pred_check_branch
        %645 = sbr.rel (%p643) target = $region48
      $region47: #{axis_portrait_attention.1} parent=5 // pred_region
        %s646 = ssub.s32 %s16, 2
        // Predicated region
        $region49: #{axis_portrait_attention.1} parent=47 // pred_check
          %p647 = pneg %p134
        $region50: #{axis_portrait_attention.1} parent=47 // pred_check_branch
          %649 = sbr.rel (%p647) target = $region52
        $region51: #{axis_portrait_attention.1} parent=47 // pred_region
          %p650 = scmp.lt.s32.totalorder %s22, 1
          %s651 = scalar_select %p650, %s22, 1
          %s652 = smul.addr %s651, 8
          %s653 = smul.addr %s652, 8
          %s654 = scalar_lea.vmem %s4, %s653
        $region52: #{axis_portrait_attention.1} parent=47 // pred_fallthru
          _
        // Predicated region
        $region53: #{axis_portrait_attention.1} parent=47 // pred_check
          %p655 = pneg %p160
        $region54: #{axis_portrait_attention.1} parent=47 // pred_check_branch
          %657 = sbr.rel (%p655) target = $region56
        $region55: #{axis_portrait_attention.1} parent=47 // pred_region
          %s658 = sand.u32 %s145, 1
          %s659 = scalar_lea.sflag [#allocation4], %s658
          %s660 = sand.u32 %s145, 1
          %s661 = smul.addr %s660, 16
          %s662 = scalar_lea.vmem [#allocation3], %s661
          %663 = dma.done %s659, 256
        $region56: #{axis_portrait_attention.1} parent=47 // pred_fallthru
          _
      $region48: #{axis_portrait_attention.1} parent=5 // pred_fallthru
        _
    $region6: #{axis_portrait_attention.1} parent=1 // loop_footer
      %s20 = sadd.s32 1, %s16
    $region7: #{axis_portrait_attention.1} parent=1 // loop_footer_branch
      %15 = sbr.rel target = $region3
    $region8: #{axis_portrait_attention.1} parent=1 // loop_exit
      _
    %664 = vsyncpa [#allocation4], 1
    %s665 = scalar_lea.sflag [#allocation4], 1
    %666 = vsyncpa %s665, 1

</llo_original>
